<compile_context>
chip_gen: v6e
topology: v6e:2x2x1
jax: 0.10.0
libtpu: 0.0.40
codegen_flags: <defaults>
</compile_context>

<pallas_src>
import math

import jax
import jax.numpy as jnp
from jax.experimental import pallas as pl
from jax.experimental.pallas import tpu as pltpu


def _round_up(x: int, m: int) -> int:
    return ((x + m - 1) // m) * m


def _vmem_capacity_bytes() -> int:
    try:
        return int(pltpu.get_tpu_info().vmem_capacity_bytes)
    except Exception:
        return 64 * 1024 * 1024  # conservative default (v7x per-TC VMEM)


def _vmem_limit(est_bytes: int, vmem_cap: int) -> int:
    # Always set an explicit scoped-VMEM limit (>= the 16/32 MiB defaults),
    # capped well below the physical capacity.
    return int(min(0.875 * vmem_cap, max(est_bytes + (16 << 20), 64 << 20)))


# --------------------------------------------------------------------------- #
# Path A: VMEM-resident table, chunked one-hot MXU gather.
# --------------------------------------------------------------------------- #
def _resident_embedding(flat_ids, table, *, tb, n_blocks, chunk, v_pad, d_pad,
                        vmem_cap):
    V, D = table.shape
    out_dtype = table.dtype
    itemsize = jnp.dtype(out_dtype).itemsize
    n_tok_pad = tb * n_blocks
    n_chunks = v_pad // chunk

    # 0/1 one-hot values and int8/fp8 table entries are exact in bf16; keep
    # f32 tables in f32.  (v7x MXU has no integer path, so never dot in int8.)
    compute_dtype = jnp.float32 if out_dtype == jnp.float32 else jnp.bfloat16

    ids2d = flat_ids.reshape(n_tok_pad, 1)
    table_p = table
    if v_pad != V or d_pad != D:
        table_p = jnp.pad(table, ((0, v_pad - V), (0, d_pad - D)))

    def kernel(ids_ref, table_ref, out_ref):
        ids = ids_ref[...]                                      # (tb, 1) int32
        lane = jax.lax.broadcasted_iota(jnp.int32, (tb, chunk), 1)

        def chunk_dot(start):
            onehot = (lane + start == ids).astype(compute_dtype)   # (tb, chunk)
            tile = table_ref[pl.ds(start, chunk), :].astype(compute_dtype)
            return jnp.dot(onehot, tile, preferred_element_type=jnp.float32)

        if n_chunks == 1:
            # Common small-vocab case: one dot + one lane-dense store.
            out_ref[...] = chunk_dot(0).astype(out_ref.dtype)
        else:
            # Accumulate directly into out_ref (exact: one hit per row).
            out_ref[...] = jnp.zeros_like(out_ref)

            def body(c, carry):
                start = pl.multiple_of(c * chunk, chunk)
                out_ref[...] += chunk_dot(start).astype(out_ref.dtype)
                return carry

            jax.lax.fori_loop(0, n_chunks, body, 0, unroll=n_chunks <= 8)

    # Conservative VMEM estimate (assumes the table ends up double-buffered,
    # counts ids lane padding and the chunked one-hot temporaries).
    est_vmem = (2 * v_pad * d_pad * itemsize
                + 2 * tb * d_pad * itemsize
                + 2 * tb * 128 * 4
                + 4 * tb * chunk * 4)

    cost = pl.CostEstimate(
        flops=2 * n_tok_pad * v_pad * d_pad,
        transcendentals=0,
        bytes_accessed=int(n_tok_pad * 4 + v_pad * d_pad * itemsize
                           + n_tok_pad * d_pad * itemsize),
    )

    def build(single_buffer_table: bool):
        if single_buffer_table:
            # Table never changes across the grid -> don't double-buffer it.
            table_spec = pl.BlockSpec((v_pad, d_pad), lambda i: (0, 0),
                                      pipeline_mode=pl.Buffered(1))
        else:
            table_spec = pl.BlockSpec((v_pad, d_pad), lambda i: (0, 0))
        return pl.pallas_call(
            kernel,
            out_shape=jax.ShapeDtypeStruct((n_tok_pad, d_pad), out_dtype),
            grid_spec=pltpu.PrefetchScalarGridSpec(
                num_scalar_prefetch=0,
                grid=(n_blocks,),
                in_specs=[
                    pl.BlockSpec((tb, 1), lambda i: (i, 0)),    # token ids
                    table_spec,                                  # resident table
                ],
                out_specs=pl.BlockSpec((tb, d_pad), lambda i: (i, 0)),
            ),
            compiler_params=pltpu.CompilerParams(
                dimension_semantics=("parallel",),
                vmem_limit_bytes=_vmem_limit(est_vmem, vmem_cap),
            ),
            cost_estimate=cost,
        )(ids2d, table_p)

    try:
        return build(True)
    except Exception:
        # Older runtimes may not support single-buffered pipeline mode.
        return build(False)


# --------------------------------------------------------------------------- #
# Path B: large table in HBM, scalar-prefetched per-row DMA gather.
# --------------------------------------------------------------------------- #
def _gather_embedding(flat_ids, table, *, tb, n_blocks, d_pad, vmem_cap,
                      window=8):
    V, D = table.shape
    out_dtype = table.dtype
    itemsize = jnp.dtype(out_dtype).itemsize
    n_tok_pad = tb * n_blocks
    window = min(window, tb)

    table_p = table
    if d_pad != D:
        # TODO(synk): production embedding dims are multiples of 128; this pad
        # copies the table once in HBM only for odd dims (kept for lane-dense
        # output stores).
        table_p = jnp.pad(table, ((0, 0), (0, d_pad - D)))

    def kernel(ids_smem, table_hbm, out_ref, sems):
        base = pl.program_id(0) * tb

        def issue(r):
            tok = ids_smem[base + r]
            pltpu.make_async_copy(table_hbm.at[tok, :], out_ref.at[r, :],
                                  sems.at[r % window]).start()

        def wait_row(r):
            pltpu.make_async_copy(table_hbm.at[0, :], out_ref.at[r, :],
                                  sems.at[r % window]).wait()

        # Sliding window of `window` row-DMAs in flight, gathered straight
        # into the output block (no extra VMEM scratch, no table streaming).
        @pl.loop(0, tb)
        def _(r):
            @pl.when(r >= window)
            def _():
                wait_row(r - window)
            issue(r)

        @pl.loop(tb - window, tb)
        def _(r):
            wait_row(r)

    est_vmem = 2 * tb * d_pad * itemsize + (4 << 20)
    cost = pl.CostEstimate(
        flops=0,
        transcendentals=0,
        bytes_accessed=int(n_tok_pad * 4 + 2 * n_tok_pad * d_pad * itemsize),
    )

    return pl.pallas_call(
        kernel,
        out_shape=jax.ShapeDtypeStruct((n_tok_pad, d_pad), out_dtype),
        grid_spec=pltpu.PrefetchScalarGridSpec(
            num_scalar_prefetch=1,                     # ids -> SMEM
            grid=(n_blocks,),
            in_specs=[pl.BlockSpec(memory_space=pl.ANY)],   # table stays in HBM
            out_specs=pl.BlockSpec((tb, d_pad), lambda i, ids: (i, 0)),
            scratch_shapes=[pltpu.SemaphoreType.DMA((window,))],
        ),
        compiler_params=pltpu.CompilerParams(
            dimension_semantics=("arbitrary",),
            vmem_limit_bytes=_vmem_limit(est_vmem, vmem_cap),
        ),
        cost_estimate=cost,
    )(flat_ids, table_p)


# --------------------------------------------------------------------------- #
# Public wrapper (== TokenEmbedding.forward)
# --------------------------------------------------------------------------- #
def token_embedding(token_ids: jax.Array, embedding_table: jax.Array, *,
                    token_block: int | None = None,
                    table_budget_bytes: int | None = None) -> jax.Array:
    """token_ids: int array of any shape; embedding_table: (V, D).

    Returns embeddings of shape token_ids.shape + (D,).
    """
    orig_shape = tuple(token_ids.shape)
    V, D = embedding_table.shape
    out_dtype = embedding_table.dtype
    itemsize = jnp.dtype(out_dtype).itemsize
    n_tokens = int(math.prod(orig_shape)) if orig_shape else 1

    d_pad = _round_up(D, 128)                  # lane-dense output stores
    row_align = max(8, 32 // itemsize)         # sublane alignment per dtype

    vmem_cap = _vmem_capacity_bytes()
    if table_budget_bytes is None:
        # ~16 MiB on v7x (64 MiB VMEM), ~48 MiB on v5e/v6e (128 MiB VMEM).
        table_budget_bytes = max(4 << 20, vmem_cap // 2 - (16 << 20))

    # Clamp ids for memory safety (PyTorch raises on OOB; documented divergence).
    flat_ids = jnp.clip(token_ids.reshape(-1).astype(jnp.int32), 0, V - 1)

    # Contraction chunk: 512 (multiple of 256 for v6e/v7x MXU, 128 for v5e).
    chunk = min(512, _round_up(V, 128))
    v_pad = _round_up(V, chunk)
    use_resident = v_pad * d_pad * itemsize <= table_budget_bytes

    if token_block is None:
        token_block = 256 if use_resident else 1024
    max_tb_by_out = max(row_align,
                        ((8 << 20) // (2 * d_pad * itemsize))
                        // row_align * row_align)
    tb = min(_round_up(token_block, row_align),
             _round_up(n_tokens, row_align),
             max_tb_by_out)
    n_tok_pad = _round_up(n_tokens, tb)
    n_blocks = n_tok_pad // tb
    if n_tok_pad != n_tokens:
        flat_ids = jnp.pad(flat_ids, (0, n_tok_pad - n_tokens))

    if use_resident:
        out_flat = _resident_embedding(flat_ids, embedding_table,
                                       tb=tb, n_blocks=n_blocks, chunk=chunk,
                                       v_pad=v_pad, d_pad=d_pad,
                                       vmem_cap=vmem_cap)
    else:
        out_flat = _gather_embedding(flat_ids, embedding_table,
                                     tb=tb, n_blocks=n_blocks, d_pad=d_pad,
                                     vmem_cap=vmem_cap)

    return out_flat[:n_tokens, :D].reshape(orig_shape + (D,))


if __name__ == "__main__":
    # Small config consistent with the module: vocab_size=64, embedding_dim=32.
    vocab_size = 64
    embedding_dim = 32
    batch = 2
    seq = 8

    key = jax.random.PRNGKey(0)
    k_emb, k_ids = jax.random.split(key)

    # Deterministic parameter init (nn.Embedding default is N(0, 1)).
    embedding_table = jax.random.normal(
        k_emb, (vocab_size, embedding_dim), dtype=jnp.float32
    )
    token_ids = jax.random.randint(
        k_ids, (batch, seq), minval=0, maxval=vocab_size, dtype=jnp.int32
    )

    ref = embedding_table[token_ids]

    # Path A: VMEM-resident one-hot MXU gather (default for this table size).
    out_resident = jax.block_until_ready(
        token_embedding(token_ids, embedding_table))
    assert out_resident.shape == (batch, seq, embedding_dim)
    assert jnp.allclose(out_resident, ref), "resident path mismatch"

    # Path B: force the large-table DMA row-gather path with a tiny budget.
    out_gather = jax.block_until_ready(
        token_embedding(token_ids, embedding_table, table_budget_bytes=1))
    assert out_gather.shape == (batch, seq, embedding_dim)
    assert jnp.array_equal(out_gather, ref), "gather path mismatch"

    print("KERNEL_OK")
</pallas_src>

<mosaic_0001>
module attributes {stable_mosaic.version = 11 : i64} {
  func.func @kernel(%arg0: i32, %arg1: memref<16x1xi32, #tpu.memory_space<vmem>>, %arg2: memref<128x128xf32, #tpu.memory_space<vmem>>, %arg3: memref<16x128xf32, #tpu.memory_space<vmem>>) attributes {dimension_semantics = [#tpu.dimension_semantics<parallel>], iteration_bounds = array<i64: 1>, scalar_prefetch = 0 : i64, scratch_operands = 0 : i64, tpu.core_type = #tpu.core_type<tc>, window_params = [{transform_indices = @transform_0, window_bounds = array<i64: 16, 1>}, {pipeline_mode = #tpu.pipeline_mode<synchronous>, transform_indices = @transform_1, window_bounds = array<i64: 128, 128>}, {transform_indices = @transform_2, window_bounds = array<i64: 16, 128>}]} {
    %c0 = arith.constant 0 : index
    %c0_0 = arith.constant 0 : index
    %0 = vector.load %arg1[%c0, %c0_0] : memref<16x1xi32, #tpu.memory_space<vmem>>, vector<16x1xi32>
    %1 = tpu.iota {dimensions = array<i32: 1>} : vector<16x128xi32>
    %c0_i32 = arith.constant 0 : i32
    %2 = vector.broadcast %c0_i32 : i32 to vector<16x128xi32>
    %3 = arith.addi %1, %2 : vector<16x128xi32>
    %4 = vector.broadcast %0 : vector<16x1xi32> to vector<16x128xi32>
    %5 = arith.cmpi eq, %3, %4 : vector<16x128xi32>
    %6 = arith.extui %5 : vector<16x128xi1> to vector<16x128xi32>
    %7 = arith.sitofp %6 : vector<16x128xi32> to vector<16x128xf32>
    %c0_1 = arith.constant 0 : index
    %c0_2 = arith.constant 0 : index
    %8 = vector.load %arg2[%c0_1, %c0_2] : memref<128x128xf32, #tpu.memory_space<vmem>>, vector<128x128xf32>
    %cst = arith.constant dense<0.000000e+00> : vector<16x128xf32>
    %9 = tpu.matmul %7, %8, %cst {dimension_numbers = #tpu.dot_dimension_numbers<[1], [0], [0], [1], [0, 0, 1, 1], [], []>} : vector<16x128xf32>, vector<128x128xf32>, vector<16x128xf32> -> vector<16x128xf32>
    %c0_3 = arith.constant 0 : index
    %c0_4 = arith.constant 0 : index
    %10 = vector.load %arg3[%c0_3, %c0_4] : memref<16x128xf32, #tpu.memory_space<vmem>>, vector<16x128xf32>
    tpu.vector_store %arg3[%c0_3, %c0_4], %9 {strides = array<i32>} : memref<16x128xf32, #tpu.memory_space<vmem>>, vector<16x128xf32>,
    return
  }
  func.func @transform_0(%arg0: i32) -> (i32, i32) {
    %c0_i32 = arith.constant 0 : i32
    %c0_i32_0 = arith.constant 0 : i32
    return %arg0, %c0_i32 : i32, i32
  }
  func.func @transform_1(%arg0: i32) -> (i32, i32) {
    %c0_i32 = arith.constant 0 : i32
    %c0_i32_0 = arith.constant 0 : i32
    %c0_i32_1 = arith.constant 0 : i32
    return %c0_i32, %c0_i32_0 : i32, i32
  }
  func.func @transform_2(%arg0: i32) -> (i32, i32) {
    %c0_i32 = arith.constant 0 : i32
    %c0_i32_0 = arith.constant 0 : i32
    return %arg0, %c0_i32 : i32, i32
  }
}

module attributes {stable_mosaic.version = 11 : i64} {
  func.func @kernel(%arg0: i32, %arg1: memref<16x1xi32, #tpu.memory_space<vmem>>, %arg2: memref<128x128xf32, #tpu.memory_space<vmem>>, %arg3: memref<16x128xf32, #tpu.memory_space<vmem>>) attributes {dimension_semantics = [#tpu.dimension_semantics<parallel>], iteration_bounds = array<i64: 1>, scalar_prefetch = 0 : i64, scratch_operands = 0 : i64, tpu.core_type = #tpu.core_type<tc>, window_params = [{transform_indices = @transform_0, window_bounds = array<i64: 16, 1>}, {pipeline_mode = #tpu.pipeline_mode<synchronous>, transform_indices = @transform_1, window_bounds = array<i64: 128, 128>}, {transform_indices = @transform_2, window_bounds = array<i64: 16, 128>}]} {
    %c0 = arith.constant 0 : index
    %c0_0 = arith.constant 0 : index
    %0 = vector.load %arg1[%c0, %c0_0] : memref<16x1xi32, #tpu.memory_space<vmem>>, vector<16x1xi32>
    %1 = tpu.iota {dimensions = array<i32: 1>} : vector<16x128xi32>
    %c0_i32 = arith.constant 0 : i32
    %2 = vector.broadcast %c0_i32 : i32 to vector<16x128xi32>
    %3 = arith.addi %1, %2 : vector<16x128xi32>
    %4 = vector.broadcast %0 : vector<16x1xi32> to vector<16x128xi32>
    %5 = arith.cmpi eq, %3, %4 : vector<16x128xi32>
    %6 = arith.extui %5 : vector<16x128xi1> to vector<16x128xi32>
    %7 = arith.sitofp %6 : vector<16x128xi32> to vector<16x128xf32>
    %c0_1 = arith.constant 0 : index
    %c0_2 = arith.constant 0 : index
    %8 = vector.load %arg2[%c0_1, %c0_2] : memref<128x128xf32, #tpu.memory_space<vmem>>, vector<128x128xf32>
    %cst = arith.constant dense<0.000000e+00> : vector<16x128xf32>
    %9 = tpu.matmul %7, %8, %cst {dimension_numbers = #tpu.dot_dimension_numbers<[1], [0], [0], [1], [0, 0, 1, 1], [], []>} : vector<16x128xf32>, vector<128x128xf32>, vector<16x128xf32> -> vector<16x128xf32>
    %c0_3 = arith.constant 0 : index
    %c0_4 = arith.constant 0 : index
    %10 = vector.load %arg3[%c0_3, %c0_4] : memref<16x128xf32, #tpu.memory_space<vmem>>, vector<16x128xf32>
    tpu.vector_store %arg3[%c0_3, %c0_4], %9 {strides = array<i32>} : memref<16x128xf32, #tpu.memory_space<vmem>>, vector<16x128xf32>,
    return
  }
  func.func @transform_0(%arg0: i32) -> (i32, i32) {
    %c0_i32 = arith.constant 0 : i32
    %c0_i32_0 = arith.constant 0 : i32
    return %arg0, %c0_i32 : i32, i32
  }
  func.func @transform_1(%arg0: i32) -> (i32, i32) {
    %c0_i32 = arith.constant 0 : i32
    %c0_i32_0 = arith.constant 0 : i32
    %c0_i32_1 = arith.constant 0 : i32
    return %c0_i32, %c0_i32_0 : i32, i32
  }
  func.func @transform_2(%arg0: i32) -> (i32, i32) {
    %c0_i32 = arith.constant 0 : i32
    %c0_i32_0 = arith.constant 0 : i32
    return %arg0, %c0_i32 : i32, i32
  }
}

</mosaic_0001>

<llo_original>
// kernel: tpu_custom_call.1
$region0: #{tpu_custom_call.1}
  #allocation0 [shape = 'u32[]', space=smem, size = 0x4, offset = 0x4, fixed_abs, tag = 'smem constant byte address 0x4 - core index']
  #allocation1 [shape = 'u32[144,128]{1,0:T(1,128)}', space=vmem, size = 0x12000, scoped, tag = 'internal scratch']
  %s0 = inlined_call_operand.vmem [shape: s32[16,1], index: 0, kind: input, shape index: {}]
  %s1 = inlined_call_operand.hbm [shape: f32[128,128], index: 1, kind: input, shape index: {}]
  %s2 = inlined_call_operand.hbm [shape: f32[16,128], index: 2, kind: output, shape index: {}]
  %s3 = sld [smem:[#allocation0]]
  $region22: #{tpu_custom_call.1} parent=0
    _
  %s5 = ssub.s32 1, %s3
  %s6 = scalar_select 0, %s5, %s3
  $region1: #{tpu_custom_call.1} parent=0
    #allocation2 [shape = 'u8[65536]{0}', space=vmem, size = 0x10000, scoped, tag = 'input window, operand 1, single buffered']
    #allocation3 [shape = 's32[1]{0}', space=sflag, size = 0x4, scoped, tag = 'scoped memory for tpu_custom_call.1']
    #allocation4 [shape = 's32[1]{0}', space=sflag, size = 0x4, scoped, tag = 'scoped memory for tpu_custom_call.1']
    #allocation5 [shape = 'u8[8192]{0}', space=vmem, size = 0x2000, scoped, tag = 'output window, operand 0, single buffered']
    %7 = vsyncpa [#allocation3], 0
    %8 = vsyncpa [#allocation4], 0
    // Predicated region
    $region2: #{tpu_custom_call.1} parent=1 // pred_check
      _
    $region3: #{tpu_custom_call.1} parent=1 // pred_check_branch
      %10 = sbr.rel (0) target = $region5
    $region4: #{tpu_custom_call.1} parent=1 // pred_region
      _
    $region5: #{tpu_custom_call.1} parent=1 // pred_fallthru
      _
    // Predicated region
    $region6: #{tpu_custom_call.1} parent=1 // pred_check
      _
    $region7: #{tpu_custom_call.1} parent=1 // pred_check_branch
      %12 = sbr.rel (0) target = $region9
    $region8: #{tpu_custom_call.1} parent=1 // pred_region
      %s14 = ssub.s32 2048, 2048
      %15 = vsyncadd [#allocation3], %s14
      %s16 = sshll.u32 [#allocation2], 4
      %s17 = int_to_ptr.vmem [resolvable:$true] %s16
      %22 = dma.hbm_to_vmem [thread:$0]  %s1, 2048, %s17, [#allocation3], 128, 128, 8
    $region9: #{tpu_custom_call.1} parent=1 // pred_fallthru
      _
    // Predicated region
    $region10: #{tpu_custom_call.1} parent=1 // pred_check
      _
    $region11: #{tpu_custom_call.1} parent=1 // pred_check_branch
      %24 = sbr.rel (0) target = $region13
    $region12: #{tpu_custom_call.1} parent=1 // pred_region
      %25 = dma.done [#allocation3], 2048
    $region13: #{tpu_custom_call.1} parent=1 // pred_fallthru
      _
    %v26 = vld [vmem:[%s0] sm:$0xff]
    %v27 = vld [vmem:[%s0 + $0x8] sm:$0xff]
    %v28 = vlaneseq
    %v29 = vand.u32 %v28, 127
    %30 = vset.pattern.permute.xlu0 0
    %31 = vperm.xlu0 %30, %v26
    %v32 = vpop.permute.xlu0 %31
    %33 = vset.pattern.permute.xlu0 0
    %34 = vperm.xlu0 %33, %v27
    %v35 = vpop.permute.xlu0 %34
    %vm36 = vcmp.eq.s32.totalorder %v29, %v32
    %vm37 = vcmp.eq.s32.totalorder %v29, %v35
    %v38 = vsel %vm36, 1, 0
    %v39 = vsel %vm37, 1, 0
    %v40 = vcvt.s32.f32 %v38
    %v41 = vcvt.s32.f32 %v39
    %v42 = vld [vmem:[#allocation2] sm:$0xff]
    %v43 = vld [vmem:[#allocation2 + $0x8] sm:$0xff]
    %v44 = vld [vmem:[#allocation2 + $0x10] sm:$0xff]
    %v45 = vld [vmem:[#allocation2 + $0x18] sm:$0xff]
    %v46 = vld [vmem:[#allocation2 + $0x20] sm:$0xff]
    %v47 = vld [vmem:[#allocation2 + $0x28] sm:$0xff]
    %v48 = vld [vmem:[#allocation2 + $0x30] sm:$0xff]
    %v49 = vld [vmem:[#allocation2 + $0x38] sm:$0xff]
    %v50 = vld [vmem:[#allocation2 + $0x40] sm:$0xff]
    %v51 = vld [vmem:[#allocation2 + $0x48] sm:$0xff]
    %v52 = vld [vmem:[#allocation2 + $0x50] sm:$0xff]
    %v53 = vld [vmem:[#allocation2 + $0x58] sm:$0xff]
    %v54 = vld [vmem:[#allocation2 + $0x60] sm:$0xff]
    %v55 = vld [vmem:[#allocation2 + $0x68] sm:$0xff]
    %v56 = vld [vmem:[#allocation2 + $0x70] sm:$0xff]
    %v57 = vld [vmem:[#allocation2 + $0x78] sm:$0xff]
    %58 = vmatprep.subr.mxu0 0.0
    %59 = vmatpush1.msra.mxu0 %v57
    %60 = vmatprep.subr.mxu0 0.0
    %61 = vmatpush1.msra.mxu0 %v56
    %62 = vmatprep.subr.mxu0 0.0
    %63 = vmatpush1.msra.mxu0 %v55
    %64 = vmatprep.subr.mxu0 0.0
    %65 = vmatpush1.msra.mxu0 %v54
    %66 = vmatprep.subr.mxu0 0.0
    %67 = vmatpush1.msra.mxu0 %v53
    %68 = vmatprep.subr.mxu0 0.0
    %69 = vmatpush1.msra.mxu0 %v52
    %70 = vmatprep.subr.mxu0 0.0
    %71 = vmatpush1.msra.mxu0 %v51
    %72 = vmatprep.subr.mxu0 0.0
    %73 = vmatpush1.msra.mxu0 %v50
    %74 = vmatprep.subr.mxu0 0.0
    %75 = vmatpush1.msra.mxu0 %v49
    %76 = vmatprep.subr.mxu0 0.0
    %77 = vmatpush1.msra.mxu0 %v48
    %78 = vmatprep.subr.mxu0 0.0
    %79 = vmatpush1.msra.mxu0 %v47
    %80 = vmatprep.subr.mxu0 0.0
    %81 = vmatpush1.msra.mxu0 %v46
    %82 = vmatprep.subr.mxu0 0.0
    %83 = vmatpush1.msra.mxu0 %v45
    %84 = vmatprep.subr.mxu0 0.0
    %85 = vmatpush1.msra.mxu0 %v44
    %86 = vmatprep.subr.mxu0 0.0
    %87 = vmatpush1.msra.mxu0 %v43
    %88 = vmatprep.subr.mxu0 0.0
    %89 = vmatpush1.msra.mxu0 %v42
    %90 = vmatprep.subr.mxu0 0.0
    %91 = vmatpush2.msra.mxu0 0.0
    %92 = vmatprep.subr.mxu0 0.0
    %93 = vmatpush2.msra.mxu0 0.0
    %94 = vmatprep.subr.mxu0 0.0
    %95 = vmatpush2.msra.mxu0 0.0
    %96 = vmatprep.subr.mxu0 0.0
    %97 = vmatpush2.msra.mxu0 0.0
    %98 = vmatprep.subr.mxu0 0.0
    %99 = vmatpush2.msra.mxu0 0.0
    %100 = vmatprep.subr.mxu0 0.0
    %101 = vmatpush2.msra.mxu0 0.0
    %102 = vmatprep.subr.mxu0 0.0
    %103 = vmatpush2.msra.mxu0 0.0
    %104 = vmatprep.subr.mxu0 0.0
    %105 = vmatpush2.msra.mxu0 0.0
    %106 = vmatprep.subr.mxu0 0.0
    %107 = vmatpush2.msra.mxu0 0.0
    %108 = vmatprep.subr.mxu0 0.0
    %109 = vmatpush2.msra.mxu0 0.0
    %110 = vmatprep.subr.mxu0 0.0
    %111 = vmatpush2.msra.mxu0 0.0
    %112 = vmatprep.subr.mxu0 0.0
    %113 = vmatpush2.msra.mxu0 0.0
    %114 = vmatprep.subr.mxu0 0.0
    %115 = vmatpush2.msra.mxu0 0.0
    %116 = vmatprep.subr.mxu0 0.0
    %117 = vmatpush2.msra.mxu0 0.0
    %118 = vmatprep.subr.mxu0 0.0
    %119 = vmatpush2.msra.mxu0 0.0
    %120 = vmatprep.subr.mxu0 0.0
    %121 = vmatpush2.msra.mxu0 0.0
    %122 = vmatprep.mubr.f32.mxu0 0.0
    %123 = vmatmul.mubr.f32.gmra.mxu0 %v40
    %v124 = vpop.f32.mrf.mxu0
    %v125 = vadd.f32 0.0, %v124
    %v126 = vpop.f32.mrf.mxu0
    %127 = vmatprep.mubr.f32.mxu0 0.0
    %128 = vmatmul.mubr.f32.gmra.mxu0 %v41
    %v129 = vpop.f32.mrf.mxu0
    %v130 = vadd.f32 0.0, %v129
    %v131 = vpop.f32.mrf.mxu0
    %132 = vdwg.mxu0
    %133 = vst [vmem:[#allocation5] sm:$0xff] %v125
    %134 = vst [vmem:[#allocation5 + $0x8] sm:$0xff] %v130
    // Predicated region
    $region14: #{tpu_custom_call.1} parent=1 // pred_check
      _
    $region15: #{tpu_custom_call.1} parent=1 // pred_check_branch
      %136 = sbr.rel (0) target = $region17
    $region16: #{tpu_custom_call.1} parent=1 // pred_region
      %s138 = ssub.s32 256, 256
      %139 = vsyncadd [#allocation4], %s138
      %s140 = sshll.u32 [#allocation5], 4
      %s141 = int_to_ptr.vmem [resolvable:$true] %s140
      %146 = dma.vmem_to_hbm [thread:$0]  %s141, 256, %s2, [#allocation4], 128, 128, 8
    $region17: #{tpu_custom_call.1} parent=1 // pred_fallthru
      _
    // Predicated region
    $region18: #{tpu_custom_call.1} parent=1 // pred_check
      _
    $region19: #{tpu_custom_call.1} parent=1 // pred_check_branch
      %148 = sbr.rel (0) target = $region21
    $region20: #{tpu_custom_call.1} parent=1 // pred_region
      %149 = dma.done [#allocation4], 256
    $region21: #{tpu_custom_call.1} parent=1 // pred_fallthru
      _
    %150 = vsyncpa [#allocation3], 1
    %151 = vsyncpa [#allocation4], 1

// kernel: tpu_custom_call.1
$region0: #{tpu_custom_call.1}
  #allocation0 [shape = 'u32[]', space=smem, size = 0x4, offset = 0x4, fixed_abs, tag = 'smem constant byte address 0x4 - core index']
  #allocation1 [shape = 'u32[144,128]{1,0:T(1,128)}', space=vmem, size = 0x12000, scoped, tag = 'internal scratch']
  %s0 = inlined_call_operand.vmem [shape: s32[16,1], index: 0, kind: input, shape index: {}]
  %s1 = inlined_call_operand.hbm [shape: f32[128,128], index: 1, kind: input, shape index: {}]
  %s2 = inlined_call_operand.hbm [shape: f32[16,128], index: 2, kind: output, shape index: {}]
  %s3 = sld [smem:[#allocation0]]
  $region22: #{tpu_custom_call.1} parent=0
    _
  %s5 = ssub.s32 1, %s3
  %s6 = scalar_select 0, %s5, %s3
  $region1: #{tpu_custom_call.1} parent=0
    #allocation2 [shape = 'u8[65536]{0}', space=vmem, size = 0x10000, scoped, tag = 'input window, operand 1, single buffered']
    #allocation3 [shape = 's32[1]{0}', space=sflag, size = 0x4, scoped, tag = 'scoped memory for tpu_custom_call.1']
    #allocation4 [shape = 's32[1]{0}', space=sflag, size = 0x4, scoped, tag = 'scoped memory for tpu_custom_call.1']
    #allocation5 [shape = 'u8[8192]{0}', space=vmem, size = 0x2000, scoped, tag = 'output window, operand 0, single buffered']
    %7 = vsyncpa [#allocation3], 0
    %8 = vsyncpa [#allocation4], 0
    // Predicated region
    $region2: #{tpu_custom_call.1} parent=1 // pred_check
      _
    $region3: #{tpu_custom_call.1} parent=1 // pred_check_branch
      %10 = sbr.rel (0) target = $region5
    $region4: #{tpu_custom_call.1} parent=1 // pred_region
      _
    $region5: #{tpu_custom_call.1} parent=1 // pred_fallthru
      _
    // Predicated region
    $region6: #{tpu_custom_call.1} parent=1 // pred_check
      _
    $region7: #{tpu_custom_call.1} parent=1 // pred_check_branch
      %12 = sbr.rel (0) target = $region9
    $region8: #{tpu_custom_call.1} parent=1 // pred_region
      %s14 = ssub.s32 2048, 2048
      %15 = vsyncadd [#allocation3], %s14
      %s16 = sshll.u32 [#allocation2], 4
      %s17 = int_to_ptr.vmem [resolvable:$true] %s16
      %22 = dma.hbm_to_vmem [thread:$0]  %s1, 2048, %s17, [#allocation3], 128, 128, 8
    $region9: #{tpu_custom_call.1} parent=1 // pred_fallthru
      _
    // Predicated region
    $region10: #{tpu_custom_call.1} parent=1 // pred_check
      _
    $region11: #{tpu_custom_call.1} parent=1 // pred_check_branch
      %24 = sbr.rel (0) target = $region13
    $region12: #{tpu_custom_call.1} parent=1 // pred_region
      %25 = dma.done [#allocation3], 2048
    $region13: #{tpu_custom_call.1} parent=1 // pred_fallthru
      _
    %v26 = vld [vmem:[%s0] sm:$0xff]
    %v27 = vld [vmem:[%s0 + $0x8] sm:$0xff]
    %v28 = vlaneseq
    %v29 = vand.u32 %v28, 127
    %30 = vset.pattern.permute.xlu0 0
    %31 = vperm.xlu0 %30, %v26
    %v32 = vpop.permute.xlu0 %31
    %33 = vset.pattern.permute.xlu0 0
    %34 = vperm.xlu0 %33, %v27
    %v35 = vpop.permute.xlu0 %34
    %vm36 = vcmp.eq.s32.totalorder %v29, %v32
    %vm37 = vcmp.eq.s32.totalorder %v29, %v35
    %v38 = vsel %vm36, 1, 0
    %v39 = vsel %vm37, 1, 0
    %v40 = vcvt.s32.f32 %v38
    %v41 = vcvt.s32.f32 %v39
    %v42 = vld [vmem:[#allocation2] sm:$0xff]
    %v43 = vld [vmem:[#allocation2 + $0x8] sm:$0xff]
    %v44 = vld [vmem:[#allocation2 + $0x10] sm:$0xff]
    %v45 = vld [vmem:[#allocation2 + $0x18] sm:$0xff]
    %v46 = vld [vmem:[#allocation2 + $0x20] sm:$0xff]
    %v47 = vld [vmem:[#allocation2 + $0x28] sm:$0xff]
    %v48 = vld [vmem:[#allocation2 + $0x30] sm:$0xff]
    %v49 = vld [vmem:[#allocation2 + $0x38] sm:$0xff]
    %v50 = vld [vmem:[#allocation2 + $0x40] sm:$0xff]
    %v51 = vld [vmem:[#allocation2 + $0x48] sm:$0xff]
    %v52 = vld [vmem:[#allocation2 + $0x50] sm:$0xff]
    %v53 = vld [vmem:[#allocation2 + $0x58] sm:$0xff]
    %v54 = vld [vmem:[#allocation2 + $0x60] sm:$0xff]
    %v55 = vld [vmem:[#allocation2 + $0x68] sm:$0xff]
    %v56 = vld [vmem:[#allocation2 + $0x70] sm:$0xff]
    %v57 = vld [vmem:[#allocation2 + $0x78] sm:$0xff]
    %58 = vmatprep.subr.mxu0 0.0
    %59 = vmatpush1.msra.mxu0 %v57
    %60 = vmatprep.subr.mxu0 0.0
    %61 = vmatpush1.msra.mxu0 %v56
    %62 = vmatprep.subr.mxu0 0.0
    %63 = vmatpush1.msra.mxu0 %v55
    %64 = vmatprep.subr.mxu0 0.0
    %65 = vmatpush1.msra.mxu0 %v54
    %66 = vmatprep.subr.mxu0 0.0
    %67 = vmatpush1.msra.mxu0 %v53
    %68 = vmatprep.subr.mxu0 0.0
    %69 = vmatpush1.msra.mxu0 %v52
    %70 = vmatprep.subr.mxu0 0.0
    %71 = vmatpush1.msra.mxu0 %v51
    %72 = vmatprep.subr.mxu0 0.0
    %73 = vmatpush1.msra.mxu0 %v50
    %74 = vmatprep.subr.mxu0 0.0
    %75 = vmatpush1.msra.mxu0 %v49
    %76 = vmatprep.subr.mxu0 0.0
    %77 = vmatpush1.msra.mxu0 %v48
    %78 = vmatprep.subr.mxu0 0.0
    %79 = vmatpush1.msra.mxu0 %v47
    %80 = vmatprep.subr.mxu0 0.0
    %81 = vmatpush1.msra.mxu0 %v46
    %82 = vmatprep.subr.mxu0 0.0
    %83 = vmatpush1.msra.mxu0 %v45
    %84 = vmatprep.subr.mxu0 0.0
    %85 = vmatpush1.msra.mxu0 %v44
    %86 = vmatprep.subr.mxu0 0.0
    %87 = vmatpush1.msra.mxu0 %v43
    %88 = vmatprep.subr.mxu0 0.0
    %89 = vmatpush1.msra.mxu0 %v42
    %90 = vmatprep.subr.mxu0 0.0
    %91 = vmatpush2.msra.mxu0 0.0
    %92 = vmatprep.subr.mxu0 0.0
    %93 = vmatpush2.msra.mxu0 0.0
    %94 = vmatprep.subr.mxu0 0.0
    %95 = vmatpush2.msra.mxu0 0.0
    %96 = vmatprep.subr.mxu0 0.0
    %97 = vmatpush2.msra.mxu0 0.0
    %98 = vmatprep.subr.mxu0 0.0
    %99 = vmatpush2.msra.mxu0 0.0
    %100 = vmatprep.subr.mxu0 0.0
    %101 = vmatpush2.msra.mxu0 0.0
    %102 = vmatprep.subr.mxu0 0.0
    %103 = vmatpush2.msra.mxu0 0.0
    %104 = vmatprep.subr.mxu0 0.0
    %105 = vmatpush2.msra.mxu0 0.0
    %106 = vmatprep.subr.mxu0 0.0
    %107 = vmatpush2.msra.mxu0 0.0
    %108 = vmatprep.subr.mxu0 0.0
    %109 = vmatpush2.msra.mxu0 0.0
    %110 = vmatprep.subr.mxu0 0.0
    %111 = vmatpush2.msra.mxu0 0.0
    %112 = vmatprep.subr.mxu0 0.0
    %113 = vmatpush2.msra.mxu0 0.0
    %114 = vmatprep.subr.mxu0 0.0
    %115 = vmatpush2.msra.mxu0 0.0
    %116 = vmatprep.subr.mxu0 0.0
    %117 = vmatpush2.msra.mxu0 0.0
    %118 = vmatprep.subr.mxu0 0.0
    %119 = vmatpush2.msra.mxu0 0.0
    %120 = vmatprep.subr.mxu0 0.0
    %121 = vmatpush2.msra.mxu0 0.0
    %122 = vmatprep.mubr.f32.mxu0 0.0
    %123 = vmatmul.mubr.f32.gmra.mxu0 %v40
    %v124 = vpop.f32.mrf.mxu0
    %v125 = vadd.f32 0.0, %v124
    %v126 = vpop.f32.mrf.mxu0
    %127 = vmatprep.mubr.f32.mxu0 0.0
    %128 = vmatmul.mubr.f32.gmra.mxu0 %v41
    %v129 = vpop.f32.mrf.mxu0
    %v130 = vadd.f32 0.0, %v129
    %v131 = vpop.f32.mrf.mxu0
    %132 = vdwg.mxu0
    %133 = vst [vmem:[#allocation5] sm:$0xff] %v125
    %134 = vst [vmem:[#allocation5 + $0x8] sm:$0xff] %v130
    // Predicated region
    $region14: #{tpu_custom_call.1} parent=1 // pred_check
      _
    $region15: #{tpu_custom_call.1} parent=1 // pred_check_branch
      %136 = sbr.rel (0) target = $region17
    $region16: #{tpu_custom_call.1} parent=1 // pred_region
      %s138 = ssub.s32 256, 256
      %139 = vsyncadd [#allocation4], %s138
      %s140 = sshll.u32 [#allocation5], 4
      %s141 = int_to_ptr.vmem [resolvable:$true] %s140
      %146 = dma.vmem_to_hbm [thread:$0]  %s141, 256, %s2, [#allocation4], 128, 128, 8
    $region17: #{tpu_custom_call.1} parent=1 // pred_fallthru
      _
    // Predicated region
    $region18: #{tpu_custom_call.1} parent=1 // pred_check
      _
    $region19: #{tpu_custom_call.1} parent=1 // pred_check_branch
      %148 = sbr.rel (0) target = $region21
    $region20: #{tpu_custom_call.1} parent=1 // pred_region
      %149 = dma.done [#allocation4], 256
    $region21: #{tpu_custom_call.1} parent=1 // pred_fallthru
      _
    %150 = vsyncpa [#allocation3], 1
    %151 = vsyncpa [#allocation4], 1

</llo_original>
